<compile_context>
chip_gen: v7x
topology: tpu7x:2x2x1
jax: 0.10.0
libtpu: 0.0.40
codegen_flags: <defaults>
</compile_context>

<pallas_src>
import jax
import jax.numpy as jnp
from jax import lax
from jax.experimental import pallas as pl
from jax.experimental.pallas import tpu as pltpu

_LANES = 128
_SUBLANES = 8


def _round_up(x, m):
    return (x + m - 1) // m * m


def _device_kind():
    try:
        return jax.devices()[0].device_kind.lower()
    except Exception:
        return ""


def _make_kernel(tile_rows, n_inner, rows_stored, need_mask, gram_dtype):
    """Kernel closure.  tile_rows % 8 == 0; rows_stored is the stored row count."""

    def kernel(l_ref, s_ref, y_ref, gram_ref, sse_ref, l1_ref,
               gram_acc, sse_acc, l1_acc):
        k = pl.program_id(2)

        @pl.when(k == 0)
        def _init():
            gram_acc[...] = jnp.zeros_like(gram_acc)
            sse_acc[...] = jnp.zeros_like(sse_acc)
            l1_acc[...] = jnp.zeros_like(l1_acc)

        l_raw = l_ref[0]                               # (tile_rows, 128) native dtype
        lf = l_raw.astype(jnp.float32)
        sf = s_ref[0].astype(jnp.float32)
        yf = y_ref[0].astype(jnp.float32)

        diff = lf + sf - yf
        abs_s = jnp.abs(sf)
        l_mm = l_raw

        if need_mask:
            # Row tail handled in-kernel (no HBM row padding): rows whose global
            # index is past the stored extent hold garbage -> zero them before
            # every reduction and before the Gram matmul.
            o = pl.program_id(1)
            row_start = (o * n_inner + k) * tile_rows
            gidx = row_start + lax.broadcasted_iota(jnp.int32, (tile_rows, 1), 0)
            valid = gidx < rows_stored
            diff = jnp.where(valid, diff, 0.0)
            abs_s = jnp.where(valid, abs_s, 0.0)
            l_mm = jnp.where(valid, l_raw, jnp.zeros_like(l_raw))

        # Raw lane-space Gram: accumulate X^T X (128x128) in f32 scratch.  The
        # loop-invariant block-diagonal fold to DxD is done once, in JAX.
        mm = l_mm.astype(gram_dtype)
        gram_acc[...] += lax.dot_general(mm, mm, (((0,), (0,)), ((), ())),
                                         preferred_element_type=jnp.float32)

        # SSE / L1: accumulate into one (8,128) vreg (pure VPU adds); the final
        # sublane/lane reduction is deferred to the cheap JAX epilogue.
        nsub = tile_rows // _SUBLANES
        sse_acc[...] += jnp.sum((diff * diff).reshape(nsub, _SUBLANES, _LANES), axis=0)
        l1_acc[...] += jnp.sum(abs_s.reshape(nsub, _SUBLANES, _LANES), axis=0)

        @pl.when(k == pl.num_programs(2) - 1)
        def _flush():
            gram_ref[0, 0] = gram_acc[...]
            sse_ref[0, 0] = sse_acc[...]
            l1_ref[0, 0] = l1_acc[...]

    return kernel


def lrs_decomp_loss(yhat, y, l_lmbda=1.0, s_lmbda=1.0, *,
                    tile_rows=None, n_outer=None, gram_matmul_dtype=None):
    """JAX/Pallas equivalent of LRSDecompLoss.forward(yhat, y)."""
    L, S = yhat
    B, C, H, W, D = L.shape
    assert C == 1, "LRSDecompLoss expects a single channel"
    assert 1 <= D <= _LANES, "kernel supports D <= 128"  # TODO(synk): D > 128 path
    HW = H * W

    kind = _device_kind()
    is_v5e = ("v5 lite" in kind) or ("v5e" in kind) or ("v5litepod" in kind)
    is_v6e = ("v6 lite" in kind) or ("v6e" in kind)

    # Feature dim padded to a power of two so each 128-lane row holds whole rows
    # of A = L[b,0].reshape(HW, D); zero columns are neutral for SSE/L1/Gram.
    d_pad = 1 << (D - 1).bit_length()
    n_flat = HW * d_pad

    # Fast path: no padding at all -> the (B, rows, 128) view is a free reshape.
    fast = (d_pad == D) and (n_flat % _LANES == 0) and (n_flat // _LANES >= _SUBLANES)
    if fast:
        rows_stored = n_flat // _LANES
    else:
        rows_stored = max(_SUBLANES, pl.cdiv(n_flat, _LANES))

    def to_dense(x):
        if fast:
            return x.reshape(B, rows_stored, _LANES)        # free bitcast, no copy
        x = x.reshape(B, HW, D)
        if d_pad != D:
            x = jnp.pad(x, ((0, 0), (0, 0), (0, d_pad - D)))
        x = x.reshape(B, HW * d_pad)
        tail = rows_stored * _LANES - HW * d_pad
        if tail:
            x = jnp.pad(x, ((0, 0), (0, tail)))
        return x.reshape(B, rows_stored, _LANES)

    l2, s2, y2 = to_dense(L), to_dense(S), to_dense(y)       # native dtype, no upcast

    # Megacore coverage: split the row axis into "parallel" chunks so odd /
    # single-batch workloads still use both TensorCores on v7x.
    if n_outer is None:
        n_outer = 2 if (B % 2 == 1) else 1

    if tile_rows is None:
        # Larger tiles / VMEM headroom on v5e/v6e (128 MiB); keep v7x (64 MiB)
        # conservative.
        tile_rows = 8192 if (is_v5e or is_v6e) else 4096
    rows_per_chunk = pl.cdiv(rows_stored, n_outer)
    tile_rows = min(tile_rows,
                    (rows_stored // _SUBLANES) * _SUBLANES,
                    _round_up(rows_per_chunk, _SUBLANES))
    tile_rows = max(_SUBLANES, (tile_rows // _SUBLANES) * _SUBLANES)
    n_inner = pl.cdiv(rows_per_chunk, tile_rows)
    nblocks_arr = pl.cdiv(rows_stored, tile_rows)
    need_mask = (n_outer * n_inner * tile_rows != rows_stored)

    if gram_matmul_dtype is None:
        if jnp.dtype(L.dtype) == jnp.float32 and is_v5e:
            # v5e: f32 MXU throughput is low -> push Gram operands in bf16
            # (accumulation stays f32 via preferred_element_type).
            gram_matmul_dtype = jnp.bfloat16
        else:
            gram_matmul_dtype = L.dtype

    def in_map(b, o, k):
        # Clamp fully out-of-range tiles onto the last real block; their
        # contribution is masked to zero inside the kernel.
        return (b, jnp.minimum(o * n_inner + k, nblocks_arr - 1), 0)

    def out_map(b, o, k):
        return (b, o, 0, 0)

    in_spec = pl.BlockSpec((1, tile_rows, _LANES), in_map)

    itemsize = jnp.dtype(L.dtype).itemsize
    steps = B * n_outer * n_inner
    cost = pl.CostEstimate(
        flops=int(steps * tile_rows * _LANES * (2 * _LANES + 8)),
        transcendentals=0,
        bytes_accessed=int(3 * B * rows_stored * _LANES * itemsize
                           + B * n_outer * (_LANES * _LANES + 2 * _SUBLANES * _LANES) * 4),
    )

    gram_parts, sse_parts, l1_parts = pl.pallas_call(
        _make_kernel(tile_rows, n_inner, rows_stored, need_mask, gram_matmul_dtype),
        grid=(B, n_outer, n_inner),
        in_specs=[in_spec, in_spec, in_spec],
        out_specs=(
            pl.BlockSpec((1, 1, _LANES, _LANES), out_map),
            pl.BlockSpec((1, 1, _SUBLANES, _LANES), out_map),
            pl.BlockSpec((1, 1, _SUBLANES, _LANES), out_map),
        ),
        out_shape=(
            jax.ShapeDtypeStruct((B, n_outer, _LANES, _LANES), jnp.float32),
            jax.ShapeDtypeStruct((B, n_outer, _SUBLANES, _LANES), jnp.float32),
            jax.ShapeDtypeStruct((B, n_outer, _SUBLANES, _LANES), jnp.float32),
        ),
        scratch_shapes=[
            pltpu.VMEM((_LANES, _LANES), jnp.float32),
            pltpu.VMEM((_SUBLANES, _LANES), jnp.float32),
            pltpu.VMEM((_SUBLANES, _LANES), jnp.float32),
        ],
        compiler_params=pltpu.CompilerParams(
            dimension_semantics=("parallel", "parallel", "arbitrary"),
            vmem_limit_bytes=(64 if (is_v5e or is_v6e) else 32) * 1024 * 1024,
        ),
        cost_estimate=cost,
    )(l2, s2, y2)

    # ------------------- tiny JAX epilogue (O(B * 128^2)) --------------------
    # Fold the raw lane-space Gram down to the DxD Gram of A = L[b,0]: lane l
    # holds column (l % d_pad) of sub-row (l // d_pad), so A^T A is the sum of
    # the (128/d_pad) diagonal d_pad x d_pad blocks of X^T X.
    gram_full = jnp.sum(gram_parts, axis=1)                   # (B, 128, 128)
    g = _LANES // d_pad
    gr = gram_full.reshape(B, g, d_pad, g, d_pad)
    eye_g = jnp.eye(g, dtype=gram_full.dtype)
    gram_d = jnp.einsum("bcidj,cd->bij", gr, eye_g)[:, :D, :D]

    # Nuclear norm via eigenvalues of A^T A.
    # TODO(synk): no Pallas eig/SVD primitive — tiny DxD eigendecomposition in plain JAX.
    eig = jnp.linalg.eigvalsh(gram_d)
    lr_penalty = jnp.sum(jnp.sqrt(jnp.clip(eig, 0.0, None)))

    mse = jnp.sum(sse_parts) / (B * C * H * W * D)            # F.mse_loss(L+S, y)
    l1_total = jnp.sum(l1_parts)                              # torch.norm(S, 1)

    # Match the PyTorch module exactly (s_lmbda is applied twice there).
    l1_penalty = s_lmbda * l1_total
    loss = mse + s_lmbda * l1_penalty + l_lmbda * lr_penalty
    return jnp.reshape(loss, (1,))


def _reference_loss(yhat, y, l_lmbda=1.0, s_lmbda=1.0):
    """Pure-JAX reference mirroring the PyTorch module."""
    L, S = yhat
    B, C, H, W, D = L.shape
    mse = jnp.mean((L + S - y) ** 2)
    l1_penalty = s_lmbda * jnp.sum(jnp.abs(S))
    mats = L.reshape(B, H * W, D)
    sv = jnp.linalg.svd(mats, compute_uv=False)
    lr_penalty = jnp.sum(sv)
    return jnp.reshape(mse + s_lmbda * l1_penalty + l_lmbda * lr_penalty, (1,))


if __name__ == "__main__":
    root = jax.random.PRNGKey(0)

    def run_case(case_key, shape, l_lmbda, s_lmbda, **kw):
        k1, k2, k3 = jax.random.split(case_key, 3)
        L = jax.random.normal(k1, shape, dtype=jnp.float32)
        S = 0.1 * jax.random.normal(k2, shape, dtype=jnp.float32)
        y = jax.random.normal(k3, shape, dtype=jnp.float32)
        ref = jax.block_until_ready(_reference_loss((L, S), y, l_lmbda, s_lmbda))
        out = jax.block_until_ready(lrs_decomp_loss((L, S), y, l_lmbda, s_lmbda, **kw))
        assert out.shape == (1,)
        assert jnp.allclose(out, ref, rtol=1e-2, atol=1e-2), (shape, kw, out, ref)

    keys = jax.random.split(root, 4)
    # Fast path (free reshape), multi-tile accumulation, non-unit lambdas
    # (exercises the double s_lmbda application matching the PyTorch module).
    run_case(keys[0], (2, 1, 16, 16, 8), 2.0, 0.5, tile_rows=8)
    # Fast path with default (auto) tiling.
    run_case(keys[1], (2, 1, 16, 16, 8), 1.0, 1.0)
    # Slow path: D=5 padded to 8, H*W*D not a multiple of 128; B=1 exercises the
    # n_outer=2 megacore chunks including a fully out-of-range (clamped) tile.
    run_case(keys[2], (1, 1, 7, 9, 5), 1.0, 1.0)
    # Partial last tile inside a chunk (in-kernel row-tail masking path).
    run_case(keys[3], (2, 1, 20, 13, 8), 0.7, 1.3, tile_rows=8)

    print("KERNEL_OK")
</pallas_src>

<mosaic_0001>
module attributes {stable_mosaic.version = 11 : i64} {
  func.func @kernel(%arg0: i32, %arg1: i32, %arg2: i32, %arg3: memref<1x8x128xf32, #tpu.memory_space<vmem>>, %arg4: memref<1x8x128xf32, #tpu.memory_space<vmem>>, %arg5: memref<1x8x128xf32, #tpu.memory_space<vmem>>, %arg6: memref<1x1x128x128xf32, #tpu.memory_space<vmem>>, %arg7: memref<1x1x8x128xf32, #tpu.memory_space<vmem>>, %arg8: memref<1x1x8x128xf32, #tpu.memory_space<vmem>>, %arg9: memref<128x128xf32, #tpu.memory_space<vmem>>, %arg10: memref<8x128xf32, #tpu.memory_space<vmem>>, %arg11: memref<8x128xf32, #tpu.memory_space<vmem>>) attributes {dimension_semantics = [#tpu.dimension_semantics<parallel>, #tpu.dimension_semantics<parallel>, #tpu.dimension_semantics<arbitrary>], iteration_bounds = array<i64: 2, 1, 2>, scalar_prefetch = 0 : i64, scratch_operands = 3 : i64, tpu.core_type = #tpu.core_type<tc>, window_params = [{transform_indices = @transform_0, window_bounds = array<i64: 1, 8, 128>}, {transform_indices = @transform_1, window_bounds = array<i64: 1, 8, 128>}, {transform_indices = @transform_2, window_bounds = array<i64: 1, 8, 128>}, {transform_indices = @transform_3, window_bounds = array<i64: 1, 1, 128, 128>}, {transform_indices = @transform_4, window_bounds = array<i64: 1, 1, 8, 128>}, {transform_indices = @transform_5, window_bounds = array<i64: 1, 1, 8, 128>}]} {
    %c0_i32 = arith.constant 0 : i32
    %0 = arith.cmpi eq, %arg2, %c0_i32 : i32
    %1 = arith.extui %0 : i1 to i32
    %c0_i32_0 = arith.constant 0 : i32
    %2 = arith.cmpi ne, %1, %c0_i32_0 : i32
    scf.if %2 {
      %cst_24 = arith.constant 0.000000e+00 : f32
      %30 = vector.broadcast %cst_24 : f32 to vector<128x128xf32>
      %c0_25 = arith.constant 0 : index
      %c0_26 = arith.constant 0 : index
      %31 = vector.load %arg9[%c0_25, %c0_26] : memref<128x128xf32, #tpu.memory_space<vmem>>, vector<128x128xf32>
      tpu.vector_store %arg9[%c0_25, %c0_26], %30 {strides = array<i32>} : memref<128x128xf32, #tpu.memory_space<vmem>>, vector<128x128xf32>,
      %cst_27 = arith.constant 0.000000e+00 : f32
      %32 = vector.broadcast %cst_27 : f32 to vector<8x128xf32>
      %c0_28 = arith.constant 0 : index
      %c0_29 = arith.constant 0 : index
      %33 = vector.load %arg10[%c0_28, %c0_29] : memref<8x128xf32, #tpu.memory_space<vmem>>, vector<8x128xf32>
      tpu.vector_store %arg10[%c0_28, %c0_29], %32 {strides = array<i32>} : memref<8x128xf32, #tpu.memory_space<vmem>>, vector<8x128xf32>,
      %cst_30 = arith.constant 0.000000e+00 : f32
      %34 = vector.broadcast %cst_30 : f32 to vector<8x128xf32>
      %c0_31 = arith.constant 0 : index
      %c0_32 = arith.constant 0 : index
      %35 = vector.load %arg11[%c0_31, %c0_32] : memref<8x128xf32, #tpu.memory_space<vmem>>, vector<8x128xf32>
      tpu.vector_store %arg11[%c0_31, %c0_32], %34 {strides = array<i32>} : memref<8x128xf32, #tpu.memory_space<vmem>>, vector<8x128xf32>,
    } else {
    }
    %c0 = arith.constant 0 : index
    %c0_1 = arith.constant 0 : index
    %c0_2 = arith.constant 0 : index
    %3 = vector.load %arg3[%c0, %c0_1, %c0_2] : memref<1x8x128xf32, #tpu.memory_space<vmem>>, vector<1x8x128xf32>
    %4 = vector.shape_cast %3 : vector<1x8x128xf32> to vector<8x128xf32>
    %c0_3 = arith.constant 0 : index
    %c0_4 = arith.constant 0 : index
    %c0_5 = arith.constant 0 : index
    %5 = vector.load %arg4[%c0_3, %c0_4, %c0_5] : memref<1x8x128xf32, #tpu.memory_space<vmem>>, vector<1x8x128xf32>
    %6 = vector.shape_cast %5 : vector<1x8x128xf32> to vector<8x128xf32>
    %c0_6 = arith.constant 0 : index
    %c0_7 = arith.constant 0 : index
    %c0_8 = arith.constant 0 : index
    %7 = vector.load %arg5[%c0_6, %c0_7, %c0_8] : memref<1x8x128xf32, #tpu.memory_space<vmem>>, vector<1x8x128xf32>
    %8 = vector.shape_cast %7 : vector<1x8x128xf32> to vector<8x128xf32>
    %9 = arith.addf %4, %6 : vector<8x128xf32>
    %10 = arith.subf %9, %8 : vector<8x128xf32>
    %11 = math.absf %6 : vector<8x128xf32>
    %c0_9 = arith.constant 0 : index
    %c0_10 = arith.constant 0 : index
    %12 = vector.load %arg9[%c0_9, %c0_10] : memref<128x128xf32, #tpu.memory_space<vmem>>, vector<128x128xf32>
    %cst = arith.constant dense<0.000000e+00> : vector<128x128xf32>
    %13 = tpu.matmul %4, %4, %cst {dimension_numbers = #tpu.dot_dimension_numbers<[0], [0], [1], [1], [0, 1, 1, 1], [], []>} : vector<8x128xf32>, vector<8x128xf32>, vector<128x128xf32> -> vector<128x128xf32>
    %14 = arith.addf %12, %13 : vector<128x128xf32>
    %c0_11 = arith.constant 0 : index
    %c0_12 = arith.constant 0 : index
    %15 = vector.load %arg9[%c0_11, %c0_12] : memref<128x128xf32, #tpu.memory_space<vmem>>, vector<128x128xf32>
    tpu.vector_store %arg9[%c0_11, %c0_12], %14 {strides = array<i32>} : memref<128x128xf32, #tpu.memory_space<vmem>>, vector<128x128xf32>,
    %c0_13 = arith.constant 0 : index
    %c0_14 = arith.constant 0 : index
    %16 = vector.load %arg10[%c0_13, %c0_14] : memref<8x128xf32, #tpu.memory_space<vmem>>, vector<8x128xf32>
    %17 = arith.mulf %10, %10 : vector<8x128xf32>
    %18 = vector.shape_cast %17 : vector<8x128xf32> to vector<1x8x128xf32>
    %cst_15 = arith.constant dense<0.000000e+00> : vector<8x128xf32>
    %19 = vector.multi_reduction <add>, %18, %cst_15 [0] : vector<1x8x128xf32> to vector<8x128xf32>
    %20 = arith.addf %16, %19 : vector<8x128xf32>
    %c0_16 = arith.constant 0 : index
    %c0_17 = arith.constant 0 : index
    %21 = vector.load %arg10[%c0_16, %c0_17] : memref<8x128xf32, #tpu.memory_space<vmem>>, vector<8x128xf32>
    tpu.vector_store %arg10[%c0_16, %c0_17], %20 {strides = array<i32>} : memref<8x128xf32, #tpu.memory_space<vmem>>, vector<8x128xf32>,
    %c0_18 = arith.constant 0 : index
    %c0_19 = arith.constant 0 : index
    %22 = vector.load %arg11[%c0_18, %c0_19] : memref<8x128xf32, #tpu.memory_space<vmem>>, vector<8x128xf32>
    %23 = vector.shape_cast %11 : vector<8x128xf32> to vector<1x8x128xf32>
    %cst_20 = arith.constant dense<0.000000e+00> : vector<8x128xf32>
    %24 = vector.multi_reduction <add>, %23, %cst_20 [0] : vector<1x8x128xf32> to vector<8x128xf32>
    %25 = arith.addf %22, %24 : vector<8x128xf32>
    %c0_21 = arith.constant 0 : index
    %c0_22 = arith.constant 0 : index
    %26 = vector.load %arg11[%c0_21, %c0_22] : memref<8x128xf32, #tpu.memory_space<vmem>>, vector<8x128xf32>
    tpu.vector_store %arg11[%c0_21, %c0_22], %25 {strides = array<i32>} : memref<8x128xf32, #tpu.memory_space<vmem>>, vector<8x128xf32>,
    %c1_i32 = arith.constant 1 : i32
    %27 = arith.cmpi eq, %arg2, %c1_i32 : i32
    %28 = arith.extui %27 : i1 to i32
    %c0_i32_23 = arith.constant 0 : i32
    %29 = arith.cmpi ne, %28, %c0_i32_23 : i32
    scf.if %29 {
      %c0_24 = arith.constant 0 : index
      %c0_25 = arith.constant 0 : index
      %30 = vector.load %arg9[%c0_24, %c0_25] : memref<128x128xf32, #tpu.memory_space<vmem>>, vector<128x128xf32>
      %c0_26 = arith.constant 0 : index
      %c0_27 = arith.constant 0 : index
      %c0_28 = arith.constant 0 : index
      %c0_29 = arith.constant 0 : index
      %31 = vector.load %arg6[%c0_26, %c0_27, %c0_28, %c0_29] : memref<1x1x128x128xf32, #tpu.memory_space<vmem>>, vector<1x1x128x128xf32>
      %32 = vector.shape_cast %31 : vector<1x1x128x128xf32> to vector<128x128xf32>
      %33 = vector.shape_cast %30 : vector<128x128xf32> to vector<1x1x128x128xf32>
      tpu.vector_store %arg6[%c0_26, %c0_27, %c0_28, %c0_29], %33 {strides = array<i32>} : memref<1x1x128x128xf32, #tpu.memory_space<vmem>>, vector<1x1x128x128xf32>,
      %c0_30 = arith.constant 0 : index
      %c0_31 = arith.constant 0 : index
      %34 = vector.load %arg10[%c0_30, %c0_31] : memref<8x128xf32, #tpu.memory_space<vmem>>, vector<8x128xf32>
      %c0_32 = arith.constant 0 : index
      %c0_33 = arith.constant 0 : index
      %c0_34 = arith.constant 0 : index
      %c0_35 = arith.constant 0 : index
      %35 = vector.load %arg7[%c0_32, %c0_33, %c0_34, %c0_35] : memref<1x1x8x128xf32, #tpu.memory_space<vmem>>, vector<1x1x8x128xf32>
      %36 = vector.shape_cast %35 : vector<1x1x8x128xf32> to vector<8x128xf32>
      %37 = vector.shape_cast %34 : vector<8x128xf32> to vector<1x1x8x128xf32>
      tpu.vector_store %arg7[%c0_32, %c0_33, %c0_34, %c0_35], %37 {strides = array<i32>} : memref<1x1x8x128xf32, #tpu.memory_space<vmem>>, vector<1x1x8x128xf32>,
      %c0_36 = arith.constant 0 : index
      %c0_37 = arith.constant 0 : index
      %38 = vector.load %arg11[%c0_36, %c0_37] : memref<8x128xf32, #tpu.memory_space<vmem>>, vector<8x128xf32>
      %c0_38 = arith.constant 0 : index
      %c0_39 = arith.constant 0 : index
      %c0_40 = arith.constant 0 : index
      %c0_41 = arith.constant 0 : index
      %39 = vector.load %arg8[%c0_38, %c0_39, %c0_40, %c0_41] : memref<1x1x8x128xf32, #tpu.memory_space<vmem>>, vector<1x1x8x128xf32>
      %40 = vector.shape_cast %39 : vector<1x1x8x128xf32> to vector<8x128xf32>
      %41 = vector.shape_cast %38 : vector<8x128xf32> to vector<1x1x8x128xf32>
      tpu.vector_store %arg8[%c0_38, %c0_39, %c0_40, %c0_41], %41 {strides = array<i32>} : memref<1x1x8x128xf32, #tpu.memory_space<vmem>>, vector<1x1x8x128xf32>,
    } else {
    }
    return
  }
  func.func @transform_0(%arg0: i32, %arg1: i32, %arg2: i32) -> (i32, i32, i32) {
    %c2_i32 = arith.constant 2 : i32
    %0 = arith.muli %arg1, %c2_i32 : i32
    %1 = arith.addi %0, %arg2 : i32
    %c1_i32 = arith.constant 1 : i32
    %2 = arith.minsi %1, %c1_i32 : i32
    %c0_i32 = arith.constant 0 : i32
    %c0_i32_0 = arith.constant 0 : i32
    return %arg0, %2, %c0_i32 : i32, i32, i32
  }
  func.func @transform_1(%arg0: i32, %arg1: i32, %arg2: i32) -> (i32, i32, i32) {
    %c2_i32 = arith.constant 2 : i32
    %0 = arith.muli %arg1, %c2_i32 : i32
    %1 = arith.addi %0, %arg2 : i32
    %c1_i32 = arith.constant 1 : i32
    %2 = arith.minsi %1, %c1_i32 : i32
    %c0_i32 = arith.constant 0 : i32
    %c0_i32_0 = arith.constant 0 : i32
    return %arg0, %2, %c0_i32 : i32, i32, i32
  }
  func.func @transform_2(%arg0: i32, %arg1: i32, %arg2: i32) -> (i32, i32, i32) {
    %c2_i32 = arith.constant 2 : i32
    %0 = arith.muli %arg1, %c2_i32 : i32
    %1 = arith.addi %0, %arg2 : i32
    %c1_i32 = arith.constant 1 : i32
    %2 = arith.minsi %1, %c1_i32 : i32
    %c0_i32 = arith.constant 0 : i32
    %c0_i32_0 = arith.constant 0 : i32
    return %arg0, %2, %c0_i32 : i32, i32, i32
  }
  func.func @transform_3(%arg0: i32, %arg1: i32, %arg2: i32) -> (i32, i32, i32, i32) {
    %c0_i32 = arith.constant 0 : i32
    %c0_i32_0 = arith.constant 0 : i32
    %c0_i32_1 = arith.constant 0 : i32
    return %arg0, %arg1, %c0_i32, %c0_i32_0 : i32, i32, i32, i32
  }
  func.func @transform_4(%arg0: i32, %arg1: i32, %arg2: i32) -> (i32, i32, i32, i32) {
    %c0_i32 = arith.constant 0 : i32
    %c0_i32_0 = arith.constant 0 : i32
    %c0_i32_1 = arith.constant 0 : i32
    return %arg0, %arg1, %c0_i32, %c0_i32_0 : i32, i32, i32, i32
  }
  func.func @transform_5(%arg0: i32, %arg1: i32, %arg2: i32) -> (i32, i32, i32, i32) {
    %c0_i32 = arith.constant 0 : i32
    %c0_i32_0 = arith.constant 0 : i32
    %c0_i32_1 = arith.constant 0 : i32
    return %arg0, %arg1, %c0_i32, %c0_i32_0 : i32, i32, i32, i32
  }
}

</mosaic_0001>

<llo_original>
// kernel: tpu_custom_call.1
$region0: #{tpu_custom_call.1}
  #allocation0 [shape = 'u32[]', space=smem, size = 0x4, offset = 0x4, fixed_abs, tag = 'smem constant byte address 0x4 - core index']
  #allocation1 [shape = 'u32[144,128]{1,0:T(1,128)}', space=vmem, size = 0x12000, scoped, tag = 'internal scratch']
  #allocation2 [shape = 'f32[128,128]{1,0:T(8,128)}', space=vmem, size = 0x10000, scoped, tag = 'scratch operand']
  #allocation3 [shape = 'f32[8,128]{1,0:T(8,128)}', space=vmem, size = 0x1000, scoped, tag = 'scratch operand']
  #allocation4 [shape = 'f32[8,128]{1,0:T(8,128)}', space=vmem, size = 0x1000, scoped, tag = 'scratch operand']
  %s0 = inlined_call_operand.hbm [shape: f32[2,16,128], index: 0, kind: input, shape index: {}]
  %s1 = inlined_call_operand.hbm [shape: f32[2,16,128], index: 1, kind: input, shape index: {}]
  %s2 = inlined_call_operand.hbm [shape: f32[2,16,128], index: 2, kind: input, shape index: {}]
  %s3 = inlined_call_operand.hbm [shape: f32[2,1,128,128], index: 3, kind: output, shape index: {0}]
  %s4 = inlined_call_operand.hbm [shape: f32[2,1,8,128], index: 4, kind: output, shape index: {1}]
  %s5 = inlined_call_operand.hbm [shape: f32[2,1,8,128], index: 5, kind: output, shape index: {2}]
  %6 = xla_tuple %s3, %s4, %s5
  %s7 = sld [smem:[#allocation0]]
  $region81: #{tpu_custom_call.1} parent=0
    _
  %s9 = ssub.s32 1, %s7
  %s10 = scalar_select 0, %s9, %s7
  $region1: #{tpu_custom_call.1} parent=0
    #allocation5 [shape = 'u8[8192]{0}', space=vmem, size = 0x2000, scoped, tag = 'input window, operand 0']
    #allocation6 [shape = 's32[2]{0}', space=sflag, size = 0x8, scoped, tag = 'scoped memory for tpu_custom_call.1']
    #allocation7 [shape = 's32[2]{0}', space=sflag, size = 0x8, scoped, tag = 'scoped memory for tpu_custom_call.1']
    #allocation8 [shape = 'u8[8192]{0}', space=vmem, size = 0x2000, scoped, tag = 'input window, operand 1']
    #allocation9 [shape = 's32[2]{0}', space=sflag, size = 0x8, scoped, tag = 'scoped memory for tpu_custom_call.1']
    #allocation10 [shape = 'u8[8192]{0}', space=vmem, size = 0x2000, scoped, tag = 'input window, operand 2']
    #allocation11 [shape = 'u8[131072]{0}', space=vmem, size = 0x20000, scoped, tag = 'output window, operand 0']
    #allocation12 [shape = 'u8[8192]{0}', space=vmem, size = 0x2000, scoped, tag = 'output window, operand 1']
    #allocation13 [shape = 's32[2]{0}', space=sflag, size = 0x8, scoped, tag = 'scoped memory for tpu_custom_call.1']
    #allocation14 [shape = 'u8[8192]{0}', space=vmem, size = 0x2000, scoped, tag = 'output window, operand 2']
    %11 = vsyncpa [#allocation6], 0
    %s12 = scalar_lea.sflag [#allocation6], 1
    %13 = vsyncpa %s12, 0
    %14 = vsyncpa [#allocation9], 0
    %s15 = scalar_lea.sflag [#allocation9], 1
    %16 = vsyncpa %s15, 0
    %17 = vsyncpa [#allocation7], 0
    %s18 = scalar_lea.sflag [#allocation7], 1
    %19 = vsyncpa %s18, 0
    %20 = vsyncpa [#allocation13], 0
    %s21 = scalar_lea.sflag [#allocation13], 1
    %22 = vsyncpa %s21, 0
    loop: start=0, step=1, limit=6
    $region2: #{tpu_custom_call.1} parent=1 // loop_pre_header
      _
    $region3: #{tpu_custom_call.1} parent=1 // loop_header
      %s24 = sphi 0, %s28
      %p25 = scmp.ge.s32.totalorder %s24, 6
      %s31 = sphi 0, %s50
      %s32 = sphi 0, %s46
      %s33 = sphi 0, %s42
      %s34 = sphi 0, %s31
      %s35 = sphi 0, %s32
      %s36 = sphi 0, %s33
      %s37 = sphi 0, %s34
      %s38 = sphi 0, %s35
      %s39 = sphi 0, %s36
      %s63 = sphi 0, %s65
      %s66 = sphi 0, %s63
      %s67 = sphi 0, %s66
      %s83 = sphi 0, %s67
      %s99 = sphi 0, %s101
      %s102 = sphi 0, %s99
      %s103 = sphi 0, %s102
      %s119 = sphi 0, %s103
      %s135 = sphi 0, %s137
      %s138 = sphi 0, %s135
      %s139 = sphi 0, %s138
      %s155 = sphi 0, %s139
      %s163 = sphi 0, %s165
      %s166 = sphi 0, %s163
      %s167 = sphi 0, %s166
      %s183 = sphi 0, %s167
      %s191 = sphi 0, %s193
      %s194 = sphi 0, %s191
      %s195 = sphi 0, %s194
      %s211 = sphi 0, %s195
      %s219 = sphi 0, %s221
      %s222 = sphi 0, %s219
      %s223 = sphi 0, %s222
      %s239 = sphi 0, %s223
    $region4: #{tpu_custom_call.1} parent=1 // loop_header_branch
      %27 = sbr.rel (%p25) target = $region8
    $region5: #{tpu_custom_call.1} parent=1 // loop_body
      %s29 = ssub.s32 %s24, 1
      %s30 = ssub.s32 %s24, 2
      %s40 = sadd.s32 1, %s33
      %p41 = scmp.ge.s32.totalorder %s40, 2
      %s42 = scalar_select %p41, 0, %s40
      %s43 = sadd.s32 1, %s32
      %s44 = scalar_select %p41, %s43, %s32
      %p45 = scmp.ge.s32.totalorder %s44, 1
      %s46 = scalar_select %p45, 0, %s44
      %s47 = sadd.s32 1, %s31
      %s48 = scalar_select %p45, %s47, %s31
      %p49 = scmp.ge.s32.totalorder %s48, 2
      %s50 = scalar_select %p49, 0, %s48
      %s51 = smul.u32 %s32, 2
      %s52 = sadd.s32 %s51, %s33
      %p53 = scmp.lt.s32.totalorder %s52, 1
      %s54 = scalar_select %p53, %s52, 1
      %s55 = smul.u32 %s46, 2
      %s56 = sadd.s32 %s55, %s42
      %p57 = scmp.lt.s32.totalorder %s56, 1
      %s58 = scalar_select %p57, %s56, 1
      %s59 = ssub.s32 %s31, %s50
      %s60 = ssub.s32 %s54, %s58
      %s61 = sor.u32 %s59, %s60
      %p62 = scmp.eq.s32.totalorder %s61, 0
      %s64 = sadd.s32 %s63, 1
      %s65 = scalar_select %p62, %s63, %s64
      %p68 = pneg %p62
      %p69 = scmp.eq.s32.totalorder %s24, 3
      %p70 = por %p68, %p69
      %p71 = scmp.ne.s32.totalorder %s63, %s66
      %p72 = scmp.eq.s32.totalorder %s24, 0
      %p73 = por %p71, %p72
      %p74 = scmp.ne.s32.totalorder %s63, %s66
      %p75 = scmp.eq.s32.totalorder %s29, 3
      %p76 = por %p74, %p75
      %p77 = scmp.ne.s32.totalorder %s66, %s67
      %p78 = scmp.eq.s32.totalorder %s29, 0
      %p79 = por %p77, %p78
      %p80 = scmp.ne.s32.totalorder %s66, %s67
      %p81 = scmp.eq.s32.totalorder %s30, 3
      %p82 = por %p80, %p81
      %p84 = scmp.ne.s32.totalorder %s67, %s83
      %p85 = scmp.eq.s32.totalorder %s30, 0
      %p86 = por %p84, %p85
      %s87 = smul.u32 %s32, 2
      %s88 = sadd.s32 %s87, %s33
      %p89 = scmp.lt.s32.totalorder %s88, 1
      %s90 = scalar_select %p89, %s88, 1
      %s91 = smul.u32 %s46, 2
      %s92 = sadd.s32 %s91, %s42
      %p93 = scmp.lt.s32.totalorder %s92, 1
      %s94 = scalar_select %p93, %s92, 1
      %s95 = ssub.s32 %s31, %s50
      %s96 = ssub.s32 %s90, %s94
      %s97 = sor.u32 %s95, %s96
      %p98 = scmp.eq.s32.totalorder %s97, 0
      %s100 = sadd.s32 %s99, 1
      %s101 = scalar_select %p98, %s99, %s100
      %p104 = pneg %p98
      %p105 = scmp.eq.s32.totalorder %s24, 3
      %p106 = por %p104, %p105
      %p107 = scmp.ne.s32.totalorder %s99, %s102
      %p108 = scmp.eq.s32.totalorder %s24, 0
      %p109 = por %p107, %p108
      %p110 = scmp.ne.s32.totalorder %s99, %s102
      %p111 = scmp.eq.s32.totalorder %s29, 3
      %p112 = por %p110, %p111
      %p113 = scmp.ne.s32.totalorder %s102, %s103
      %p114 = scmp.eq.s32.totalorder %s29, 0
      %p115 = por %p113, %p114
      %p116 = scmp.ne.s32.totalorder %s102, %s103
      %p117 = scmp.eq.s32.totalorder %s30, 3
      %p118 = por %p116, %p117
      %p120 = scmp.ne.s32.totalorder %s103, %s119
      %p121 = scmp.eq.s32.totalorder %s30, 0
      %p122 = por %p120, %p121
      %s123 = smul.u32 %s32, 2
      %s124 = sadd.s32 %s123, %s33
      %p125 = scmp.lt.s32.totalorder %s124, 1
      %s126 = scalar_select %p125, %s124, 1
      %s127 = smul.u32 %s46, 2
      %s128 = sadd.s32 %s127, %s42
      %p129 = scmp.lt.s32.totalorder %s128, 1
      %s130 = scalar_select %p129, %s128, 1
      %s131 = ssub.s32 %s31, %s50
      %s132 = ssub.s32 %s126, %s130
      %s133 = sor.u32 %s131, %s132
      %p134 = scmp.eq.s32.totalorder %s133, 0
      %s136 = sadd.s32 %s135, 1
      %s137 = scalar_select %p134, %s135, %s136
      %p140 = pneg %p134
      %p141 = scmp.eq.s32.totalorder %s24, 3
      %p142 = por %p140, %p141
      %p143 = scmp.ne.s32.totalorder %s135, %s138
      %p144 = scmp.eq.s32.totalorder %s24, 0
      %p145 = por %p143, %p144
      %p146 = scmp.ne.s32.totalorder %s135, %s138
      %p147 = scmp.eq.s32.totalorder %s29, 3
      %p148 = por %p146, %p147
      %p149 = scmp.ne.s32.totalorder %s138, %s139
      %p150 = scmp.eq.s32.totalorder %s29, 0
      %p151 = por %p149, %p150
      %p152 = scmp.ne.s32.totalorder %s138, %s139
      %p153 = scmp.eq.s32.totalorder %s30, 3
      %p154 = por %p152, %p153
      %p156 = scmp.ne.s32.totalorder %s139, %s155
      %p157 = scmp.eq.s32.totalorder %s30, 0
      %p158 = por %p156, %p157
      %s159 = ssub.s32 %s31, %s50
      %s160 = ssub.s32 %s32, %s46
      %s161 = sor.u32 %s159, %s160
      %p162 = scmp.eq.s32.totalorder %s161, 0
      %s164 = sadd.s32 %s163, 1
      %s165 = scalar_select %p162, %s163, %s164
      %p168 = pneg %p162
      %p169 = scmp.eq.s32.totalorder %s24, 3
      %p170 = por %p168, %p169
      %p171 = scmp.ne.s32.totalorder %s163, %s166
      %p172 = scmp.eq.s32.totalorder %s24, 0
      %p173 = por %p171, %p172
      %p174 = scmp.ne.s32.totalorder %s163, %s166
      %p175 = scmp.eq.s32.totalorder %s29, 3
      %p176 = por %p174, %p175
      %p177 = scmp.ne.s32.totalorder %s166, %s167
      %p178 = scmp.eq.s32.totalorder %s29, 0
      %p179 = por %p177, %p178
      %p180 = scmp.ne.s32.totalorder %s166, %s167
      %p181 = scmp.eq.s32.totalorder %s30, 3
      %p182 = por %p180, %p181
      %p184 = scmp.ne.s32.totalorder %s167, %s183
      %p185 = scmp.eq.s32.totalorder %s30, 0
      %p186 = por %p184, %p185
      %s187 = ssub.s32 %s31, %s50
      %s188 = ssub.s32 %s32, %s46
      %s189 = sor.u32 %s187, %s188
      %p190 = scmp.eq.s32.totalorder %s189, 0
      %s192 = sadd.s32 %s191, 1
      %s193 = scalar_select %p190, %s191, %s192
      %p196 = pneg %p190
      %p197 = scmp.eq.s32.totalorder %s24, 3
      %p198 = por %p196, %p197
      %p199 = scmp.ne.s32.totalorder %s191, %s194
      %p200 = scmp.eq.s32.totalorder %s24, 0
      %p201 = por %p199, %p200
      %p202 = scmp.ne.s32.totalorder %s191, %s194
      %p203 = scmp.eq.s32.totalorder %s29, 3
      %p204 = por %p202, %p203
      %p205 = scmp.ne.s32.totalorder %s194, %s195
      %p206 = scmp.eq.s32.totalorder %s29, 0
      %p207 = por %p205, %p206
      %p208 = scmp.ne.s32.totalorder %s194, %s195
      %p209 = scmp.eq.s32.totalorder %s30, 3
      %p210 = por %p208, %p209
      %p212 = scmp.ne.s32.totalorder %s195, %s211
      %p213 = scmp.eq.s32.totalorder %s30, 0
      %p214 = por %p212, %p213
      %s215 = ssub.s32 %s31, %s50
      %s216 = ssub.s32 %s32, %s46
      %s217 = sor.u32 %s215, %s216
      %p218 = scmp.eq.s32.totalorder %s217, 0
      %s220 = sadd.s32 %s219, 1
      %s221 = scalar_select %p218, %s219, %s220
      %p224 = pneg %p218
      %p225 = scmp.eq.s32.totalorder %s24, 3
      %p226 = por %p224, %p225
      %p227 = scmp.ne.s32.totalorder %s219, %s222
      %p228 = scmp.eq.s32.totalorder %s24, 0
      %p229 = por %p227, %p228
      %p230 = scmp.ne.s32.totalorder %s219, %s222
      %p231 = scmp.eq.s32.totalorder %s29, 3
      %p232 = por %p230, %p231
      %p233 = scmp.ne.s32.totalorder %s222, %s223
      %p234 = scmp.eq.s32.totalorder %s29, 0
      %p235 = por %p233, %p234
      %p236 = scmp.ne.s32.totalorder %s222, %s223
      %p237 = scmp.eq.s32.totalorder %s30, 3
      %p238 = por %p236, %p237
      %p240 = scmp.ne.s32.totalorder %s223, %s239
      %p241 = scmp.eq.s32.totalorder %s30, 0
      %p242 = por %p240, %p241
      %p243 = scmp.le.s32.totalorder 1, %s24
      %p244 = scmp.lt.s32.totalorder %s24, 5
      %p245 = pnand %p243, %p244
      %p246 = pneg %p245
      // Predicated region
      $region9: #{tpu_custom_call.1} parent=5 // pred_check
        _
      $region10: #{tpu_custom_call.1} parent=5 // pred_check_branch
        %248 = sbr.rel (%p245) target = $region12
      $region11: #{tpu_custom_call.1} parent=5 // pred_region
        %s249 = ssub.s32 %s24, 1
      $region12: #{tpu_custom_call.1} parent=5 // pred_fallthru
        _
      %p250 = scmp.lt.s32.totalorder %s24, 4
      // Predicated region
      $region13: #{tpu_custom_call.1} parent=5 // pred_check
        %p251 = pneg %p250
      $region14: #{tpu_custom_call.1} parent=5 // pred_check_branch
        %253 = sbr.rel (%p251) target = $region16
      $region15: #{tpu_custom_call.1} parent=5 // pred_region
        // Predicated region
        $region17: #{tpu_custom_call.1} parent=15 // pred_check
          %p254 = pneg %p73
        $region18: #{tpu_custom_call.1} parent=15 // pred_check_branch
          %256 = sbr.rel (%p254) target = $region20
        $region19: #{tpu_custom_call.1} parent=15 // pred_region
          %s257 = sand.u32 %s63, 1
          %s258 = scalar_lea.sflag [#allocation6], %s257
          %s259 = sand.u32 %s63, 1
          %s260 = smul.addr %s259, 8
          %s261 = scalar_lea.vmem [#allocation5], %s260
          %s262 = smul.u32 %s32, 2
          %s263 = sadd.s32 %s262, %s33
          %p264 = scmp.lt.s32.totalorder %s263, 1
          %s265 = scalar_select %p264, %s263, 1
          %s267 = ssub.s32 128, 128
          %268 = vsyncadd %s258, %s267
          %s269 = smul.addr %s31, 2
          %s270 = sadd.s32 %s265, %s269
          %s271 = smul.addr %s270, 128
          %s272 = scalar_lea.hbm %s0, %s271
          %s274 = sshll.u32 %s261, 4
          %s275 = int_to_ptr.vmem [resolvable:$true] %s274
          %277 = dma.hbm_to_vmem [thread:$0]  %s272, 128, %s275, %s258
        $region20: #{tpu_custom_call.1} parent=15 // pred_fallthru
          _
        // Predicated region
        $region21: #{tpu_custom_call.1} parent=15 // pred_check
          %p278 = pneg %p109
        $region22: #{tpu_custom_call.1} parent=15 // pred_check_branch
          %280 = sbr.rel (%p278) target = $region24
        $region23: #{tpu_custom_call.1} parent=15 // pred_region
          %s281 = sand.u32 %s24, 1
          %s282 = scalar_lea.sflag [#allocation9], %s281
          %s283 = sand.u32 %s99, 1
          %s284 = smul.addr %s283, 8
          %s285 = scalar_lea.vmem [#allocation8], %s284
          %s286 = smul.u32 %s32, 2
          %s287 = sadd.s32 %s286, %s33
          %p288 = scmp.lt.s32.totalorder %s287, 1
          %s289 = scalar_select %p288, %s287, 1
          %s291 = ssub.s32 128, 128
          %292 = vsyncadd %s282, %s291
          %s293 = smul.addr %s31, 2
          %s294 = sadd.s32 %s289, %s293
          %s295 = smul.addr %s294, 128
          %s296 = scalar_lea.hbm %s1, %s295
          %s298 = sshll.u32 %s285, 4
          %s299 = int_to_ptr.vmem [resolvable:$true] %s298
          %301 = dma.hbm_to_vmem [thread:$0]  %s296, 128, %s299, %s282
        $region24: #{tpu_custom_call.1} parent=15 // pred_fallthru
          _
        // Predicated region
        $region25: #{tpu_custom_call.1} parent=15 // pred_check
          %p302 = pneg %p145
        $region26: #{tpu_custom_call.1} parent=15 // pred_check_branch
          %304 = sbr.rel (%p302) target = $region28
        $region27: #{tpu_custom_call.1} parent=15 // pred_region
          %s305 = sand.u32 %s24, 1
          %s306 = scalar_lea.sflag [#allocation9], %s305
          %s307 = sand.u32 %s135, 1
          %s308 = smul.addr %s307, 8
          %s309 = scalar_lea.vmem [#allocation10], %s308
          %s310 = smul.u32 %s32, 2
          %s311 = sadd.s32 %s310, %s33
          %p312 = scmp.lt.s32.totalorder %s311, 1
          %s313 = scalar_select %p312, %s311, 1
          %s315 = ssub.s32 128, 128
          %316 = vsyncadd %s306, %s315
          %s317 = smul.addr %s31, 2
          %s318 = sadd.s32 %s313, %s317
          %s319 = smul.addr %s318, 128
          %s320 = scalar_lea.hbm %s2, %s319
          %s322 = sshll.u32 %s309, 4
          %s323 = int_to_ptr.vmem [resolvable:$true] %s322
          %325 = dma.hbm_to_vmem [thread:$0]  %s320, 128, %s323, %s306
        $region28: #{tpu_custom_call.1} parent=15 // pred_fallthru
          _
      $region16: #{tpu_custom_call.1} parent=5 // pred_fallthru
        _
      %p326 = scmp.le.s32.totalorder 1, %s24
      %p327 = scmp.lt.s32.totalorder %s24, 5
      %p328 = pnand %p326, %p327
      %p329 = pneg %p328
      // Predicated region
      $region29: #{tpu_custom_call.1} parent=5 // pred_check
        _
      $region30: #{tpu_custom_call.1} parent=5 // pred_check_branch
        %331 = sbr.rel (%p328) target = $region32
      $region31: #{tpu_custom_call.1} parent=5 // pred_region
        %s332 = ssub.s32 %s24, 1
        %s333 = sand.u32 %s66, 1
        %s334 = scalar_lea.sflag [#allocation6], %s333
        %s335 = sand.u32 %s66, 1
        %s336 = smul.addr %s335, 8
        %s337 = scalar_lea.vmem [#allocation5], %s336
        // Predicated region
        $region33: #{tpu_custom_call.1} parent=31 // pred_check
          %p338 = pneg %p79
        $region34: #{tpu_custom_call.1} parent=31 // pred_check_branch
          %340 = sbr.rel (%p338) target = $region36
        $region35: #{tpu_custom_call.1} parent=31 // pred_region
          %341 = dma.done %s334, 128
        $region36: #{tpu_custom_call.1} parent=31 // pred_fallthru
          _
        %s342 = sand.u32 %s29, 1
        %s343 = scalar_lea.sflag [#allocation9], %s342
        %s344 = sand.u32 %s102, 1
        %s345 = smul.addr %s344, 8
        %s346 = scalar_lea.vmem [#allocation8], %s345
        // Predicated region
        $region37: #{tpu_custom_call.1} parent=31 // pred_check
          %p347 = pneg %p115
        $region38: #{tpu_custom_call.1} parent=31 // pred_check_branch
          %349 = sbr.rel (%p347) target = $region40
        $region39: #{tpu_custom_call.1} parent=31 // pred_region
          %350 = dma.done %s343, 128
        $region40: #{tpu_custom_call.1} parent=31 // pred_fallthru
          _
        %s351 = sand.u32 %s29, 1
        %s352 = scalar_lea.sflag [#allocation9], %s351
        %s353 = sand.u32 %s138, 1
        %s354 = smul.addr %s353, 8
        %s355 = scalar_lea.vmem [#allocation10], %s354
        // Predicated region
        $region41: #{tpu_custom_call.1} parent=31 // pred_check
          %p356 = pneg %p151
        $region42: #{tpu_custom_call.1} parent=31 // pred_check_branch
          %358 = sbr.rel (%p356) target = $region44
        $region43: #{tpu_custom_call.1} parent=31 // pred_region
          %359 = dma.done %s352, 128
        $region44: #{tpu_custom_call.1} parent=31 // pred_fallthru
          _
        %s360 = sand.u32 %s66, 1
        %s361 = scalar_lea.sflag [#allocation6], %s360
        %s362 = sand.u32 %s66, 1
        %s363 = smul.addr %s362, 8
        %s364 = scalar_lea.vmem [#allocation5], %s363
        %p365 = pneg %p79
        %p366 = pneg %p76
        %s367 = sand.u32 %s29, 1
        %s368 = scalar_lea.sflag [#allocation9], %s367
        %s369 = sand.u32 %s102, 1
        %s370 = smul.addr %s369, 8
        %s371 = scalar_lea.vmem [#allocation8], %s370
        %p372 = pneg %p115
        %p373 = pneg %p112
        %s374 = sand.u32 %s29, 1
        %s375 = scalar_lea.sflag [#allocation9], %s374
        %s376 = sand.u32 %s138, 1
        %s377 = smul.addr %s376, 8
        %s378 = scalar_lea.vmem [#allocation10], %s377
        %p379 = pneg %p151
        %p380 = pneg %p148
        %p381 = pneg %p179
        %p382 = pneg %p176
        %s383 = sand.u32 %s166, 1
        %s384 = scalar_lea.sflag [#allocation7], %s383
        %s385 = sand.u32 %s166, 1
        %s386 = smul.addr %s385, 128
        %s387 = scalar_lea.vmem [#allocation11], %s386
        %p388 = pneg %p207
        %p389 = pneg %p204
        %s390 = sand.u32 %s29, 1
        %s391 = scalar_lea.sflag [#allocation13], %s390
        %s392 = sand.u32 %s194, 1
        %s393 = smul.addr %s392, 8
        %s394 = scalar_lea.vmem [#allocation12], %s393
        %p395 = pneg %p235
        %p396 = pneg %p232
        %s397 = sand.u32 %s29, 1
        %s398 = scalar_lea.sflag [#allocation13], %s397
        %s399 = sand.u32 %s222, 1
        %s400 = smul.addr %s399, 8
        %s401 = scalar_lea.vmem [#allocation14], %s400
        %s402 = smul.u32 %s35, 2
        %s403 = sadd.s32 %s402, %s36
        %p404 = scmp.lt.s32.totalorder %s403, 1
        %s405 = scalar_select %p404, %s403, 1
        %s406 = smul.u32 %s35, 2
        %s407 = sadd.s32 %s406, %s36
        %p408 = scmp.lt.s32.totalorder %s407, 1
        %s409 = scalar_select %p408, %s407, 1
        %s410 = smul.u32 %s35, 2
        %s411 = sadd.s32 %s410, %s36
        %p412 = scmp.lt.s32.totalorder %s411, 1
        %s413 = scalar_select %p412, %s411, 1
        %p414 = scmp.eq.s32.totalorder %s36, 0
        // Predicated region
        $region45: #{tpu_custom_call.1} parent=31 // pred_check
          %p415 = pneg %p414
        $region46: #{tpu_custom_call.1} parent=31 // pred_check_branch
          %417 = sbr.rel (%p415) target = $region48
        $region47: #{tpu_custom_call.1} parent=31 // pred_region
          %418 = vst [vmem:[#allocation2] sm:$0xff] 0.0
          %419 = vst [vmem:[#allocation2 + $0x8] sm:$0xff] 0.0
          %420 = vst [vmem:[#allocation2 + $0x10] sm:$0xff] 0.0
          %421 = vst [vmem:[#allocation2 + $0x18] sm:$0xff] 0.0
          %422 = vst [vmem:[#allocation2 + $0x20] sm:$0xff] 0.0
          %423 = vst [vmem:[#allocation2 + $0x28] sm:$0xff] 0.0
          %424 = vst [vmem:[#allocation2 + $0x30] sm:$0xff] 0.0
          %425 = vst [vmem:[#allocation2 + $0x38] sm:$0xff] 0.0
          %426 = vst [vmem:[#allocation2 + $0x40] sm:$0xff] 0.0
          %427 = vst [vmem:[#allocation2 + $0x48] sm:$0xff] 0.0
          %428 = vst [vmem:[#allocation2 + $0x50] sm:$0xff] 0.0
          %429 = vst [vmem:[#allocation2 + $0x58] sm:$0xff] 0.0
          %430 = vst [vmem:[#allocation2 + $0x60] sm:$0xff] 0.0
          %431 = vst [vmem:[#allocation2 + $0x68] sm:$0xff] 0.0
          %432 = vst [vmem:[#allocation2 + $0x70] sm:$0xff] 0.0
          %433 = vst [vmem:[#allocation2 + $0x78] sm:$0xff] 0.0
          %434 = vst [vmem:[#allocation3] sm:$0xff] 0.0
          %435 = vst [vmem:[#allocation4] sm:$0xff] 0.0
        $region48: #{tpu_custom_call.1} parent=31 // pred_fallthru
          _
        %v436 = vld [vmem:[%s337] sm:$0xff]
        %v437 = vld [vmem:[%s346] sm:$0xff]
        %v438 = vld [vmem:[%s355] sm:$0xff]
        %v439 = vadd.f32 %v436, %v437
        %v440 = vsub.f32 %v439, %v438
        %v441 = vand.u32 2147483647, %v437
        %v442 = vld [vmem:[#allocation2] sm:$0xff]
        %v443 = vld [vmem:[#allocation2 + $0x8] sm:$0xff]
        %v444 = vld [vmem:[#allocation2 + $0x10] sm:$0xff]
        %v445 = vld [vmem:[#allocation2 + $0x18] sm:$0xff]
        %v446 = vld [vmem:[#allocation2 + $0x20] sm:$0xff]
        %v447 = vld [vmem:[#allocation2 + $0x28] sm:$0xff]
        %v448 = vld [vmem:[#allocation2 + $0x30] sm:$0xff]
        %v449 = vld [vmem:[#allocation2 + $0x38] sm:$0xff]
        %v450 = vld [vmem:[#allocation2 + $0x40] sm:$0xff]
        %v451 = vld [vmem:[#allocation2 + $0x48] sm:$0xff]
        %v452 = vld [vmem:[#allocation2 + $0x50] sm:$0xff]
        %v453 = vld [vmem:[#allocation2 + $0x58] sm:$0xff]
        %v454 = vld [vmem:[#allocation2 + $0x60] sm:$0xff]
        %v455 = vld [vmem:[#allocation2 + $0x68] sm:$0xff]
        %v456 = vld [vmem:[#allocation2 + $0x70] sm:$0xff]
        %v457 = vld [vmem:[#allocation2 + $0x78] sm:$0xff]
        %458 = vxpose.xlu0.b32.start [1/16] %v436, 128
        %459 = vxpose.xlu0.b32.cont [2/16] 0.0, 128
        %460 = vxpose.xlu0.b32.cont [3/16] 0.0, 128
        %461 = vxpose.xlu0.b32.cont [4/16] 0.0, 128
        %462 = vxpose.xlu0.b32.cont [5/16] 0.0, 128
        %463 = vxpose.xlu0.b32.cont [6/16] 0.0, 128
        %464 = vxpose.xlu0.b32.cont [7/16] 0.0, 128
        %465 = vxpose.xlu0.b32.cont [8/16] 0.0, 128
        %466 = vxpose.xlu0.b32.cont [9/16] 0.0, 128
        %467 = vxpose.xlu0.b32.cont [10/16] 0.0, 128
        %468 = vxpose.xlu0.b32.cont [11/16] 0.0, 128
        %469 = vxpose.xlu0.b32.cont [12/16] 0.0, 128
        %470 = vxpose.xlu0.b32.cont [13/16] 0.0, 128
        %471 = vxpose.xlu0.b32.cont [14/16] 0.0, 128
        %472 = vxpose.xlu0.b32.cont [15/16] 0.0, 128
        %473 = vxpose.xlu0.b32.end [16/16] 0.0, 128
        %v474 = vpop.trf.xlu0
        %v475 = vpop.trf.xlu0
        %v476 = vpop.trf.xlu0
        %v477 = vpop.trf.xlu0
        %v478 = vpop.trf.xlu0
        %v479 = vpop.trf.xlu0
        %v480 = vpop.trf.xlu0
        %v481 = vpop.trf.xlu0
        %v482 = vpop.trf.xlu0
        %v483 = vpop.trf.xlu0
        %v484 = vpop.trf.xlu0
        %v485 = vpop.trf.xlu0
        %v486 = vpop.trf.xlu0
        %v487 = vpop.trf.xlu0
        %v488 = vpop.trf.xlu0
        %v489 = vpop.trf.xlu0
        %vm490 = vcmask 64512
        %v492 = vsel %vm490, %v474, 0
        %v495 = vsel %vm490, %v475, 0
        %v498 = vsel %vm490, %v476, 0
        %v501 = vsel %vm490, %v477, 0
        %v504 = vsel %vm490, %v478, 0
        %v507 = vsel %vm490, %v479, 0
        %v510 = vsel %vm490, %v480, 0
        %v513 = vsel %vm490, %v481, 0
        %v516 = vsel %vm490, %v482, 0
        %v519 = vsel %vm490, %v483, 0
        %v522 = vsel %vm490, %v484, 0
        %v525 = vsel %vm490, %v485, 0
        %v528 = vsel %vm490, %v486, 0
        %v531 = vsel %vm490, %v487, 0
        %v534 = vsel %vm490, %v488, 0
        %v537 = vsel %vm490, %v489, 0
        %539 = vmatprep.subr.mxu0 0.0
        %540 = vmatpush1.msra.mxu0 %v436
        %541 = vmatprep.subr.mxu0 0.0
        %542 = vmatpush1.msra.mxu0 0.0
        %543 = vmatprep.subr.mxu0 0.0
        %544 = vmatpush1.msra.mxu0 0.0
        %545 = vmatprep.subr.mxu0 0.0
        %546 = vmatpush1.msra.mxu0 0.0
        %547 = vmatprep.subr.mxu0 0.0
        %548 = vmatpush1.msra.mxu0 0.0
        %549 = vmatprep.subr.mxu0 0.0
        %550 = vmatpush1.msra.mxu0 0.0
        %551 = vmatprep.subr.mxu0 0.0
        %552 = vmatpush1.msra.mxu0 0.0
        %553 = vmatprep.subr.mxu0 0.0
        %554 = vmatpush1.msra.mxu0 0.0
        %555 = vmatprep.subr.mxu0 0.0
        %556 = vmatpush1.msra.mxu0 0.0
        %557 = vmatprep.subr.mxu0 0.0
        %558 = vmatpush1.msra.mxu0 0.0
        %559 = vmatprep.subr.mxu0 0.0
        %560 = vmatpush1.msra.mxu0 0.0
        %561 = vmatprep.subr.mxu0 0.0
        %562 = vmatpush1.msra.mxu0 0.0
        %563 = vmatprep.subr.mxu0 0.0
        %564 = vmatpush1.msra.mxu0 0.0
        %565 = vmatprep.subr.mxu0 0.0
        %566 = vmatpush1.msra.mxu0 0.0
        %567 = vmatprep.subr.mxu0 0.0
        %568 = vmatpush1.msra.mxu0 0.0
        %569 = vmatprep.subr.mxu0 0.0
        %570 = vmatpush1.msra.mxu0 0.0
        %571 = vmatprep.subr.mxu0 0.0
        %572 = vmatpush1.msra.mxu0 0.0
        %573 = vmatprep.subr.mxu0 0.0
        %574 = vmatpush1.msra.mxu0 0.0
        %575 = vmatprep.subr.mxu0 0.0
        %576 = vmatpush1.msra.mxu0 0.0
        %577 = vmatprep.subr.mxu0 0.0
        %578 = vmatpush1.msra.mxu0 0.0
        %579 = vmatprep.subr.mxu0 0.0
        %580 = vmatpush1.msra.mxu0 0.0
        %581 = vmatprep.subr.mxu0 0.0
        %582 = vmatpush1.msra.mxu0 0.0
        %583 = vmatprep.subr.mxu0 0.0
        %584 = vmatpush1.msra.mxu0 0.0
        %585 = vmatprep.subr.mxu0 0.0
        %586 = vmatpush1.msra.mxu0 0.0
        %587 = vmatprep.subr.mxu0 0.0
        %588 = vmatpush1.msra.mxu0 0.0
        %589 = vmatprep.subr.mxu0 0.0
        %590 = vmatpush1.msra.mxu0 0.0
        %591 = vmatprep.subr.mxu0 0.0
        %592 = vmatpush1.msra.mxu0 0.0
        %593 = vmatprep.subr.mxu0 0.0
        %594 = vmatpush1.msra.mxu0 0.0
        %595 = vmatprep.subr.mxu0 0.0
        %596 = vmatpush1.msra.mxu0 0.0
        %597 = vmatprep.subr.mxu0 0.0
        %598 = vmatpush1.msra.mxu0 0.0
        %599 = vmatprep.subr.mxu0 0.0
        %600 = vmatpush1.msra.mxu0 0.0
        %601 = vmatprep.subr.mxu0 0.0
        %602 = vmatpush1.msra.mxu0 0.0
        %603 = vmatprep.mubr.f32.mxu0 0.0
        %604 = vmatmul.mubr.f32.gmra.mrb[0].mxu0 %v492
        %v605 = vpop.f32.mrb[0].mxu0
        %v606 = vadd.f32 0.0, %v605
        %v607 = vpop.f32.mrb[0].mxu0
        %608 = vmatprep.mubr.f32.mxu0 0.0
        %609 = vmatmul.mubr.f32.gmra.mrb[0].mxu0 %v495
        %v610 = vpop.f32.mrb[0].mxu0
        %v611 = vadd.f32 0.0, %v610
        %v612 = vpop.f32.mrb[0].mxu0
        %613 = vmatprep.mubr.f32.mxu0 0.0
        %614 = vmatmul.mubr.f32.gmra.mrb[0].mxu0 %v498
        %v615 = vpop.f32.mrb[0].mxu0
        %v616 = vadd.f32 0.0, %v615
        %v617 = vpop.f32.mrb[0].mxu0
        %618 = vmatprep.mubr.f32.mxu0 0.0
        %619 = vmatmul.mubr.f32.gmra.mrb[0].mxu0 %v501
        %v620 = vpop.f32.mrb[0].mxu0
        %v621 = vadd.f32 0.0, %v620
        %v622 = vpop.f32.mrb[0].mxu0
        %623 = vmatprep.mubr.f32.mxu0 0.0
        %624 = vmatmul.mubr.f32.gmra.mrb[0].mxu0 %v504
        %v625 = vpop.f32.mrb[0].mxu0
        %v626 = vadd.f32 0.0, %v625
        %v627 = vpop.f32.mrb[0].mxu0
        %628 = vmatprep.mubr.f32.mxu0 0.0
        %629 = vmatmul.mubr.f32.gmra.mrb[0].mxu0 %v507
        %v630 = vpop.f32.mrb[0].mxu0
        %v631 = vadd.f32 0.0, %v630
        %v632 = vpop.f32.mrb[0].mxu0
        %633 = vmatprep.mubr.f32.mxu0 0.0
        %634 = vmatmul.mubr.f32.gmra.mrb[0].mxu0 %v510
        %v635 = vpop.f32.mrb[0].mxu0
        %v636 = vadd.f32 0.0, %v635
        %v637 = vpop.f32.mrb[0].mxu0
        %638 = vmatprep.mubr.f32.mxu0 0.0
        %639 = vmatmul.mubr.f32.gmra.mrb[0].mxu0 %v513
        %v640 = vpop.f32.mrb[0].mxu0
        %v641 = vadd.f32 0.0, %v640
        %v642 = vpop.f32.mrb[0].mxu0
        %643 = vmatprep.mubr.f32.mxu0 0.0
        %644 = vmatmul.mubr.f32.gmra.mrb[0].mxu0 %v516
        %v645 = vpop.f32.mrb[0].mxu0
        %v646 = vadd.f32 0.0, %v645
        %v647 = vpop.f32.mrb[0].mxu0
        %648 = vmatprep.mubr.f32.mxu0 0.0
        %649 = vmatmul.mubr.f32.gmra.mrb[0].mxu0 %v519
        %v650 = vpop.f32.mrb[0].mxu0
        %v651 = vadd.f32 0.0, %v650
        %v652 = vpop.f32.mrb[0].mxu0
        %653 = vmatprep.mubr.f32.mxu0 0.0
        %654 = vmatmul.mubr.f32.gmra.mrb[0].mxu0 %v522
        %v655 = vpop.f32.mrb[0].mxu0
        %v656 = vadd.f32 0.0, %v655
        %v657 = vpop.f32.mrb[0].mxu0
        %658 = vmatprep.mubr.f32.mxu0 0.0
        %659 = vmatmul.mubr.f32.gmra.mrb[0].mxu0 %v525
        %v660 = vpop.f32.mrb[0].mxu0
        %v661 = vadd.f32 0.0, %v660
        %v662 = vpop.f32.mrb[0].mxu0
        %663 = vmatprep.mubr.f32.mxu0 0.0
        %664 = vmatmul.mubr.f32.gmra.mrb[0].mxu0 %v528
        %v665 = vpop.f32.mrb[0].mxu0
        %v666 = vadd.f32 0.0, %v665
        %v667 = vpop.f32.mrb[0].mxu0
        %668 = vmatprep.mubr.f32.mxu0 0.0
        %669 = vmatmul.mubr.f32.gmra.mrb[0].mxu0 %v531
        %v670 = vpop.f32.mrb[0].mxu0
        %v671 = vadd.f32 0.0, %v670
        %v672 = vpop.f32.mrb[0].mxu0
        %673 = vmatprep.mubr.f32.mxu0 0.0
        %674 = vmatmul.mubr.f32.gmra.mrb[0].mxu0 %v534
        %v675 = vpop.f32.mrb[0].mxu0
        %v676 = vadd.f32 0.0, %v675
        %v677 = vpop.f32.mrb[0].mxu0
        %678 = vmatprep.mubr.f32.mxu0 0.0
        %679 = vmatmul.mubr.f32.gmra.mrb[0].mxu0 %v537
        %v680 = vpop.f32.mrb[0].mxu0
        %v681 = vadd.f32 0.0, %v680
        %v682 = vpop.f32.mrb[0].mxu0
        %683 = vdwg.mxu0
        %v684 = vadd.f32 %v442, %v606
        %v685 = vadd.f32 %v443, %v611
        %v686 = vadd.f32 %v444, %v616
        %v687 = vadd.f32 %v445, %v621
        %v688 = vadd.f32 %v446, %v626
        %v689 = vadd.f32 %v447, %v631
        %v690 = vadd.f32 %v448, %v636
        %v691 = vadd.f32 %v449, %v641
        %v692 = vadd.f32 %v450, %v646
        %v693 = vadd.f32 %v451, %v651
        %v694 = vadd.f32 %v452, %v656
        %v695 = vadd.f32 %v453, %v661
        %v696 = vadd.f32 %v454, %v666
        %v697 = vadd.f32 %v455, %v671
        %v698 = vadd.f32 %v456, %v676
        %v699 = vadd.f32 %v457, %v681
        %700 = vst [vmem:[#allocation2] sm:$0xff] %v684
        %701 = vst [vmem:[#allocation2 + $0x8] sm:$0xff] %v685
        %702 = vst [vmem:[#allocation2 + $0x10] sm:$0xff] %v686
        %703 = vst [vmem:[#allocation2 + $0x18] sm:$0xff] %v687
        %704 = vst [vmem:[#allocation2 + $0x20] sm:$0xff] %v688
        %705 = vst [vmem:[#allocation2 + $0x28] sm:$0xff] %v689
        %706 = vst [vmem:[#allocation2 + $0x30] sm:$0xff] %v690
        %707 = vst [vmem:[#allocation2 + $0x38] sm:$0xff] %v691
        %708 = vst [vmem:[#allocation2 + $0x40] sm:$0xff] %v692
        %709 = vst [vmem:[#allocation2 + $0x48] sm:$0xff] %v693
        %710 = vst [vmem:[#allocation2 + $0x50] sm:$0xff] %v694
        %711 = vst [vmem:[#allocation2 + $0x58] sm:$0xff] %v695
        %712 = vst [vmem:[#allocation2 + $0x60] sm:$0xff] %v696
        %713 = vst [vmem:[#allocation2 + $0x68] sm:$0xff] %v697
        %714 = vst [vmem:[#allocation2 + $0x70] sm:$0xff] %v698
        %715 = vst [vmem:[#allocation2 + $0x78] sm:$0xff] %v699
        %v716 = vld [vmem:[#allocation3] sm:$0xff]
        %v717 = vmul.f32 %v440, %v440
        %v718 = vadd.f32 %v717, 0.0
        %v719 = vadd.f32 %v716, %v718
        %720 = vst [vmem:[#allocation3] sm:$0xff] %v719
        %v721 = vld [vmem:[#allocation4] sm:$0xff]
        %v722 = vadd.f32 %v441, 0.0
        %v723 = vadd.f32 %v721, %v722
        %724 = vst [vmem:[#allocation4] sm:$0xff] %v723
        %p725 = scmp.eq.s32.totalorder %s36, 1
        // Predicated region
        $region49: #{tpu_custom_call.1} parent=31 // pred_check
          %p726 = pneg %p725
        $region50: #{tpu_custom_call.1} parent=31 // pred_check_branch
          %728 = sbr.rel (%p726) target = $region52
        $region51: #{tpu_custom_call.1} parent=31 // pred_region
          %v729 = vld [vmem:[#allocation2] sm:$0xff]
          %v730 = vld [vmem:[#allocation2 + $0x8] sm:$0xff]
          %v731 = vld [vmem:[#allocation2 + $0x10] sm:$0xff]
          %v732 = vld [vmem:[#allocation2 + $0x18] sm:$0xff]
          %v733 = vld [vmem:[#allocation2 + $0x20] sm:$0xff]
          %v734 = vld [vmem:[#allocation2 + $0x28] sm:$0xff]
          %v735 = vld [vmem:[#allocation2 + $0x30] sm:$0xff]
          %v736 = vld [vmem:[#allocation2 + $0x38] sm:$0xff]
          %v737 = vld [vmem:[#allocation2 + $0x40] sm:$0xff]
          %v738 = vld [vmem:[#allocation2 + $0x48] sm:$0xff]
          %v739 = vld [vmem:[#allocation2 + $0x50] sm:$0xff]
          %v740 = vld [vmem:[#allocation2 + $0x58] sm:$0xff]
          %v741 = vld [vmem:[#allocation2 + $0x60] sm:$0xff]
          %v742 = vld [vmem:[#allocation2 + $0x68] sm:$0xff]
          %v743 = vld [vmem:[#allocation2 + $0x70] sm:$0xff]
          %v744 = vld [vmem:[#allocation2 + $0x78] sm:$0xff]
          %745 = vst [vmem:[%s387] sm:$0xff] %v729
          %746 = vst [vmem:[%s387 + $0x8] sm:$0xff] %v730
          %747 = vst [vmem:[%s387 + $0x10] sm:$0xff] %v731
          %748 = vst [vmem:[%s387 + $0x18] sm:$0xff] %v732
          %749 = vst [vmem:[%s387 + $0x20] sm:$0xff] %v733
          %750 = vst [vmem:[%s387 + $0x28] sm:$0xff] %v734
          %751 = vst [vmem:[%s387 + $0x30] sm:$0xff] %v735
          %752 = vst [vmem:[%s387 + $0x38] sm:$0xff] %v736
          %753 = vst [vmem:[%s387 + $0x40] sm:$0xff] %v737
          %754 = vst [vmem:[%s387 + $0x48] sm:$0xff] %v738
          %755 = vst [vmem:[%s387 + $0x50] sm:$0xff] %v739
          %756 = vst [vmem:[%s387 + $0x58] sm:$0xff] %v740
          %757 = vst [vmem:[%s387 + $0x60] sm:$0xff] %v741
          %758 = vst [vmem:[%s387 + $0x68] sm:$0xff] %v742
          %759 = vst [vmem:[%s387 + $0x70] sm:$0xff] %v743
          %760 = vst [vmem:[%s387 + $0x78] sm:$0xff] %v744
          %v761 = vld [vmem:[#allocation3] sm:$0xff]
          %762 = vst [vmem:[%s394] sm:$0xff] %v761
          %v763 = vld [vmem:[#allocation4] sm:$0xff]
          %764 = vst [vmem:[%s401] sm:$0xff] %v763
        $region52: #{tpu_custom_call.1} parent=31 // pred_fallthru
          _
        %s765 = sand.u32 %s166, 1
        %s766 = scalar_lea.sflag [#allocation7], %s765
        %s767 = sand.u32 %s166, 1
        %s768 = smul.addr %s767, 128
        %s769 = scalar_lea.vmem [#allocation11], %s768
        %s770 = sand.u32 %s29, 1
        %s771 = scalar_lea.sflag [#allocation13], %s770
        %s772 = sand.u32 %s194, 1
        %s773 = smul.addr %s772, 8
        %s774 = scalar_lea.vmem [#allocation12], %s773
        %s775 = sand.u32 %s29, 1
        %s776 = scalar_lea.sflag [#allocation13], %s775
        %s777 = sand.u32 %s222, 1
        %s778 = smul.addr %s777, 8
        %s779 = scalar_lea.vmem [#allocation14], %s778
        // Predicated region
        $region53: #{tpu_custom_call.1} parent=31 // pred_check
          %p780 = pneg %p176
        $region54: #{tpu_custom_call.1} parent=31 // pred_check_branch
          %782 = sbr.rel (%p780) target = $region56
        $region55: #{tpu_custom_call.1} parent=31 // pred_region
          %s784 = ssub.s32 2048, 2048
          %785 = vsyncadd %s766, %s784
          %s786 = smul.addr %s35, 16
          %s787 = smul.addr %s34, 16
          %s788 = sadd.s32 %s786, %s787
          %s789 = smul.addr %s788, 128
          %s790 = scalar_lea.hbm %s3, %s789
          %s791 = sshll.u32 %s769, 4
          %s792 = int_to_ptr.vmem [resolvable:$true] %s791
          %797 = dma.vmem_to_hbm [thread:$0]  %s792, 2048, %s790, %s766, 128, 128, 8
        $region56: #{tpu_custom_call.1} parent=31 // pred_fallthru
          _
        // Predicated region
        $region57: #{tpu_custom_call.1} parent=31 // pred_check
          %p798 = pneg %p204
        $region58: #{tpu_custom_call.1} parent=31 // pred_check_branch
          %800 = sbr.rel (%p798) target = $region60
        $region59: #{tpu_custom_call.1} parent=31 // pred_region
          %s802 = ssub.s32 128, 128
          %803 = vsyncadd %s771, %s802
          %s804 = sadd.s32 %s35, %s34
          %s805 = smul.addr %s804, 128
          %s806 = scalar_lea.hbm %s4, %s805
          %s808 = sshll.u32 %s774, 4
          %s809 = int_to_ptr.vmem [resolvable:$true] %s808
          %811 = dma.vmem_to_hbm [thread:$0]  %s809, 128, %s806, %s771
        $region60: #{tpu_custom_call.1} parent=31 // pred_fallthru
          _
        // Predicated region
        $region61: #{tpu_custom_call.1} parent=31 // pred_check
          %p812 = pneg %p232
        $region62: #{tpu_custom_call.1} parent=31 // pred_check_branch
          %814 = sbr.rel (%p812) target = $region64
        $region63: #{tpu_custom_call.1} parent=31 // pred_region
          %s816 = ssub.s32 128, 128
          %817 = vsyncadd %s776, %s816
          %s818 = sadd.s32 %s35, %s34
          %s819 = smul.addr %s818, 128
          %s820 = scalar_lea.hbm %s5, %s819
          %s822 = sshll.u32 %s779, 4
          %s823 = int_to_ptr.vmem [resolvable:$true] %s822
          %825 = dma.vmem_to_hbm [thread:$0]  %s823, 128, %s820, %s776
        $region64: #{tpu_custom_call.1} parent=31 // pred_fallthru
          _
      $region32: #{tpu_custom_call.1} parent=5 // pred_fallthru
        _
      %p826 = scmp.le.s32.totalorder 2, %s24
      // Predicated region
      $region65: #{tpu_custom_call.1} parent=5 // pred_check
        %p827 = pneg %p826
      $region66: #{tpu_custom_call.1} parent=5 // pred_check_branch
        %829 = sbr.rel (%p827) target = $region68
      $region67: #{tpu_custom_call.1} parent=5 // pred_region
        %s830 = ssub.s32 %s24, 2
        // Predicated region
        $region69: #{tpu_custom_call.1} parent=67 // pred_check
          %p831 = pneg %p182
        $region70: #{tpu_custom_call.1} parent=67 // pred_check_branch
          %833 = sbr.rel (%p831) target = $region72
        $region71: #{tpu_custom_call.1} parent=67 // pred_region
          %s834 = sand.u32 %s167, 1
          %s835 = scalar_lea.sflag [#allocation7], %s834
          %s836 = sand.u32 %s167, 1
          %s837 = smul.addr %s836, 128
          %s838 = scalar_lea.vmem [#allocation11], %s837
          %839 = dma.done %s835, 2048
        $region72: #{tpu_custom_call.1} parent=67 // pred_fallthru
          _
        // Predicated region
        $region73: #{tpu_custom_call.1} parent=67 // pred_check
          %p840 = pneg %p210
        $region74: #{tpu_custom_call.1} parent=67 // pred_check_branch
          %842 = sbr.rel (%p840) target = $region76
        $region75: #{tpu_custom_call.1} parent=67 // pred_region
          %s843 = sand.u32 %s30, 1
          %s844 = scalar_lea.sflag [#allocation13], %s843
          %s845 = sand.u32 %s195, 1
          %s846 = smul.addr %s845, 8
          %s847 = scalar_lea.vmem [#allocation12], %s846
          %848 = dma.done %s844, 128
        $region76: #{tpu_custom_call.1} parent=67 // pred_fallthru
          _
        // Predicated region
        $region77: #{tpu_custom_call.1} parent=67 // pred_check
          %p849 = pneg %p238
        $region78: #{tpu_custom_call.1} parent=67 // pred_check_branch
          %851 = sbr.rel (%p849) target = $region80
        $region79: #{tpu_custom_call.1} parent=67 // pred_region
          %s852 = sand.u32 %s30, 1
          %s853 = scalar_lea.sflag [#allocation13], %s852
          %s854 = sand.u32 %s223, 1
          %s855 = smul.addr %s854, 8
          %s856 = scalar_lea.vmem [#allocation14], %s855
          %857 = dma.done %s853, 128
        $region80: #{tpu_custom_call.1} parent=67 // pred_fallthru
          _
      $region68: #{tpu_custom_call.1} parent=5 // pred_fallthru
        _
    $region6: #{tpu_custom_call.1} parent=1 // loop_footer
      %s28 = sadd.s32 1, %s24
    $region7: #{tpu_custom_call.1} parent=1 // loop_footer_branch
      %23 = sbr.rel target = $region3
    $region8: #{tpu_custom_call.1} parent=1 // loop_exit
      _
    %858 = vsyncpa [#allocation6], 1
    %s859 = scalar_lea.sflag [#allocation6], 1
    %860 = vsyncpa %s859, 1
    %861 = vsyncpa [#allocation9], 1
    %s862 = scalar_lea.sflag [#allocation9], 1
    %863 = vsyncpa %s862, 1
    %864 = vsyncpa [#allocation7], 1
    %s865 = scalar_lea.sflag [#allocation7], 1
    %866 = vsyncpa %s865, 1
    %867 = vsyncpa [#allocation13], 1
    %s868 = scalar_lea.sflag [#allocation13], 1
    %869 = vsyncpa %s868, 1

</llo_original>
